<compile_context>
chip_gen: v6e
topology: v6e:2x2x1
jax: 0.10.0
libtpu: 0.0.40
codegen_flags: <defaults>
</compile_context>

<pallas_src>
import functools

import numpy as np
import jax
import jax.numpy as jnp
from jax.experimental import pallas as pl
from jax.experimental.pallas import tpu as pltpu

NUM_FEATURES = 8      # num_features of the module
HID1 = 32             # conv1 out channels per head
HEADS1 = 4
HID2 = 16             # conv2 out channels
NEG_SLOPE = 0.2       # GATConv leaky_relu slope
BN_EPS = 1e-5


# ----------------------------------------------------------------------------
# Packed-parameter slab layout (width = HEADS1*HID1 = 128 lanes, f32).
# ----------------------------------------------------------------------------
def _slab_layout(n):
    layout = {}
    r = 0

    def take(name, nrows, ncols):
        nonlocal r
        r = ((r + 7) // 8) * 8            # 8-sublane-align every section
        layout[name] = (r, r + nrows, ncols)
        r += nrows

    hc = HEADS1 * HID1                    # 128
    take("w1", NUM_FEATURES, hc)          # BN-folded conv1 weight       [F,128]
    take("hb", 1, hc)                     # BN-folded shift @ W1         [1,128]
    take("b1", 1, hc)                     # conv1 bias                   [1,128]
    take("asrc1", HEADS1 * n, hc)         # head-expanded att_src        [4n,128]
    take("adst1", HEADS1 * n, hc)         # head-expanded att_dst        [4n,128]
    take("hmask", HEADS1 * n, hc)         # head block-diagonal mask     [4n,128]
    take("msum", n, HEADS1 * n)           # head-block fold-back matrix  [n,4n]
    take("w2t", HID2, hc)                 # conv2 weight (transposed)    [16,128]
    take("asrc2", n, HID2)                # conv2 att_src (row-expanded) [n,16]
    take("adst2", n, HID2)                # conv2 att_dst (row-expanded) [n,16]
    take("b2", 1, HID2)                   # conv2 bias                   [1,16]
    take("wl", 1, HID2)                   # linear weight as a row       [1,16]
    take("bl", 1, 1)                      # linear bias                  [1,1]
    return layout, ((r + 7) // 8) * 8


# ----------------------------------------------------------------------------
# Kernel
# ----------------------------------------------------------------------------
def _gat_attention(h, adj, asrc_exp, adst_exp, heads):
    """Head-batched masked GAT attention + aggregation (all 2-D).

    h        : [N, D]        transformed node features
    adj      : [N, N]        dense mask, adj[dst, src] in {0,1} (self-loops incl.)
    asrc_exp : [heads*N, D]  row (hd*N+d) = att_src[hd] on head-hd lanes, else 0
    adst_exp : [heads*N, D]  same for att_dst
    returns  : [heads*N, D]  row (hd*N+d) = sum_s alpha_hd[d,s] * h[s,:]
    """
    if heads > 1:
        hstack = jnp.concatenate([h] * heads, axis=0)      # [heads*N, D]
        adj_s = jnp.concatenate([adj] * heads, axis=0)     # [heads*N, N]
    else:
        hstack, adj_s = h, adj

    # logits: e[hd*N+d, s] = a_dst[d, hd] + a_src[s, hd]
    a_dst = jnp.sum(hstack * adst_exp, axis=1, keepdims=True)          # [hN, 1]
    a_src = jax.lax.dot_general(asrc_exp, h, (((1,), (1,)), ((), ())),
                                preferred_element_type=jnp.float32)    # [hN, N]
    e = a_dst + a_src
    e = jnp.where(e > 0.0, e, NEG_SLOPE * e)               # leaky_relu

    # softmax over src; mask once AFTER exp (unmasked rowmax is still an upper
    # bound, so this stays numerically safe) and clamp the denominator so a
    # neighbor-less row cannot produce NaN.
    p = jnp.exp(e - jnp.max(e, axis=1, keepdims=True)) * adj_s
    denom = jnp.maximum(jnp.sum(p, axis=1, keepdims=True), 1e-30)
    alpha = p * pl.reciprocal(denom, approx=True)
    return jnp.dot(alpha, h, preferred_element_type=jnp.float32)       # [hN, D]


def net_kernel(x_ref, adj_ref, pool_ref, slab_ref, out_ref, *, layout):
    def ld(name):
        s, e, c = layout[name]
        return slab_ref[s:e, 0:c]

    x = x_ref[...]                                         # [N, F]
    adj = adj_ref[...]                                     # [N, N]

    # --- GATConv1 (heads=4, concat) with BatchNorm folded into w1 / hb ---
    h = jnp.dot(x, ld("w1"), preferred_element_type=jnp.float32) + ld("hb")  # [N,128]
    agg = _gat_attention(h, adj, ld("asrc1"), ld("adst1"), HEADS1)           # [4N,128]
    # keep only each row-block's own head lanes, then fold the 4 stacked
    # copies back into [N, 4*32] with one matmul (== per-head concat).
    x1 = jnp.dot(ld("msum"), agg * ld("hmask"),
                 preferred_element_type=jnp.float32) + ld("b1")              # [N,128]
    x1 = jnp.where(x1 > 0.0, x1, jnp.exp(x1) - 1.0)        # ELU
    # F.dropout: identity in eval mode.

    # --- GATConv2 (heads=1, concat=False -> mean of one head == identity) ---
    h2 = jax.lax.dot_general(x1, ld("w2t"), (((1,), (1,)), ((), ())),
                             preferred_element_type=jnp.float32)             # [N,16]
    x2 = _gat_attention(h2, adj, ld("asrc2"), ld("adst2"), 1) + ld("b2")     # [N,16]

    # --- global_mean_pool + ReLU + Linear(16, 1) ---
    pooled = jnp.dot(pool_ref[...], x2, preferred_element_type=jnp.float32)  # [G,16]
    pooled = jnp.maximum(pooled, 0.0)
    out_ref[...] = jnp.sum(pooled * ld("wl"), axis=1, keepdims=True) + ld("bl")


@jax.jit
def net_forward(x, adj, pool, slab):
    n = x.shape[0]
    g = pool.shape[0]
    layout, _ = _slab_layout(n)
    vmem = pl.BlockSpec(memory_space=pltpu.MemorySpace.VMEM)
    # Single invocation, no grid: at N=16 everything fits in VMEM trivially.
    # TODO(synk): if N is scaled up, add a grid over dst-node tiles with
    # dimension_semantics=("parallel",) (v7x 2-TC) and a bf16/int8 adjacency.
    return pl.pallas_call(
        functools.partial(net_kernel, layout=layout),
        out_shape=jax.ShapeDtypeStruct((g, 1), jnp.float32),
        in_specs=[vmem, vmem, vmem, vmem],
        out_specs=vmem,
    )(x, adj, pool, slab)


# ----------------------------------------------------------------------------
# Host-side, one-time parameter preprocessing (BN folding + head expansion)
# ----------------------------------------------------------------------------
def pack_params(params, n):
    (gamma, beta, mean, var, w1, as1, ad1, b1,
     w2, as2, ad2, b2, wl, bl) = [np.asarray(p, np.float32) for p in params]
    layout, total_rows = _slab_layout(n)
    slab = np.zeros((total_rows, HEADS1 * HID1), np.float32)

    def put(name, val):
        s, e, c = layout[name]
        slab[s:e, 0:c] = val

    # Fold eval-mode BatchNorm:  y = x*scale + shift
    scale = gamma / np.sqrt(var + BN_EPS)                  # [1, F]
    shift = beta - mean * scale                            # [1, F]
    put("w1", scale.reshape(-1, 1) * w1)                   # [F, 128]
    put("hb", shift @ w1)                                  # [1, 128]
    put("b1", b1)

    hc = HEADS1 * HID1
    asrc = np.zeros((HEADS1, hc), np.float32)
    adst = np.zeros((HEADS1, hc), np.float32)
    for hd in range(HEADS1):
        asrc[hd, hd * HID1:(hd + 1) * HID1] = as1[hd]
        adst[hd, hd * HID1:(hd + 1) * HID1] = ad1[hd]
    put("asrc1", np.repeat(asrc, n, axis=0))               # [4n, 128]
    put("adst1", np.repeat(adst, n, axis=0))               # [4n, 128]

    rows = np.arange(HEADS1 * n)
    cols = np.arange(hc)
    put("hmask", (rows[:, None] // n == cols[None, :] // HID1).astype(np.float32))
    put("msum", (np.arange(n)[:, None] == rows[None, :] % n).astype(np.float32))

    put("w2t", w2.T)                                       # [16, 128]
    put("asrc2", np.repeat(as2, n, axis=0))                # [n, 16]
    put("adst2", np.repeat(ad2, n, axis=0))                # [n, 16]
    put("b2", b2)
    put("wl", wl.T)                                        # [1, 16]
    put("bl", bl)
    return jnp.asarray(slab)


# ----------------------------------------------------------------------------
# Pure-JAX reference (original unpacked math), parameter init, example graph
# ----------------------------------------------------------------------------
def net_reference(x, adj, pool, params):
    (gamma, beta, mean, var, w1, as1, ad1, b1,
     w2, as2, ad2, b2, wl, bl) = params
    x = (x - mean) / jnp.sqrt(var + BN_EPS) * gamma + beta

    def gat(x, w, a_s, a_d, bias, heads, c, concat):
        h = x @ w
        outs = []
        for hd in range(heads):
            hh = h[:, hd * c:(hd + 1) * c]
            a_src = hh @ a_s[hd]
            a_dst = hh @ a_d[hd]
            e = a_dst[:, None] + a_src[None, :]
            e = jnp.where(e > 0, e, NEG_SLOPE * e)
            e = jnp.where(adj > 0, e, -1e30)
            p = jax.nn.softmax(e, axis=1)
            outs.append(p @ hh)
        o = jnp.concatenate(outs, axis=1) if concat else sum(outs) / heads
        return o + bias

    x = gat(x, w1, as1, ad1, b1, HEADS1, HID1, True)
    x = jnp.where(x > 0, x, jnp.exp(x) - 1.0)
    x = gat(x, w2, as2, ad2, b2, 1, HID2, False)
    x = jnp.maximum(pool @ x, 0.0)
    return x @ wl + bl


def init_params(key):
    ks = jax.random.split(key, 12)
    f = NUM_FEATURES

    def nrm(k, shape, fan_in):
        return jax.random.normal(k, shape, jnp.float32) * jnp.sqrt(2.0 / fan_in)

    return (
        1.0 + 0.1 * jax.random.normal(ks[0], (1, f), jnp.float32),   # bn gamma
        0.1 * jax.random.normal(ks[1], (1, f), jnp.float32),         # bn beta
        jnp.zeros((1, f), jnp.float32),                              # bn running_mean
        jnp.ones((1, f), jnp.float32),                               # bn running_var
        nrm(ks[2], (f, HEADS1 * HID1), f),                           # conv1 W
        nrm(ks[3], (HEADS1, HID1), HID1),                            # conv1 att_src
        nrm(ks[4], (HEADS1, HID1), HID1),                            # conv1 att_dst
        0.1 * jax.random.normal(ks[5], (1, HEADS1 * HID1), jnp.float32),  # conv1 bias
        nrm(ks[6], (HEADS1 * HID1, HID2), HEADS1 * HID1),            # conv2 W
        nrm(ks[7], (1, HID2), HID2),                                 # conv2 att_src
        nrm(ks[8], (1, HID2), HID2),                                 # conv2 att_dst
        0.1 * jax.random.normal(ks[9], (1, HID2), jnp.float32),      # conv2 bias
        nrm(ks[10], (HID2, 1), HID2),                                # linear W
        0.1 * jax.random.normal(ks[11], (1, 1), jnp.float32),        # linear b
    )


def build_graph(n_per_graph=8, num_graphs=2):
    """Two path graphs (bidirectional edges), self-loops, mean-pool matrix."""
    n = n_per_graph * num_graphs
    adj = np.zeros((n, n), np.float32)
    for g in range(num_graphs):
        base = g * n_per_graph
        for i in range(n_per_graph - 1):
            s, d = base + i, base + i + 1
            adj[d, s] = 1.0                 # edge s -> d   (adj[dst, src])
            adj[s, d] = 1.0                 # edge d -> s
    adj = np.minimum(adj + np.eye(n, dtype=np.float32), 1.0)   # self loops
    pool = np.zeros((num_graphs, n), np.float32)
    for g in range(num_graphs):
        pool[g, g * n_per_graph:(g + 1) * n_per_graph] = 1.0 / n_per_graph
    return jnp.asarray(adj), jnp.asarray(pool)


if __name__ == "__main__":
    key = jax.random.PRNGKey(0)
    k_x, k_p = jax.random.split(key)

    n_per_graph, num_graphs = 8, 2
    n = n_per_graph * num_graphs                          # 16 nodes total
    x = jax.random.normal(k_x, (n, NUM_FEATURES), jnp.float32)
    adj, pool = build_graph(n_per_graph, num_graphs)
    params = init_params(k_p)
    slab = pack_params(params, n)                         # one-time host packing

    out = net_forward(x, adj, pool, slab)
    jax.block_until_ready(out)

    with jax.default_matmul_precision("float32"):
        ref = net_reference(x, adj, pool, params)

    assert out.shape == (num_graphs, 1)
    assert bool(jnp.all(jnp.isfinite(out)))
    np.testing.assert_allclose(np.asarray(out), np.asarray(ref), rtol=5e-2, atol=5e-3)
    print("KERNEL_OK")
</pallas_src>

<mosaic_0001>
module attributes {stable_mosaic.version = 11 : i64} {
  func.func @net_kernel(%arg0: memref<16x8xf32, #tpu.memory_space<vmem>>, %arg1: memref<16x16xf32, #tpu.memory_space<vmem>>, %arg2: memref<2x16xf32, #tpu.memory_space<vmem>>, %arg3: memref<304x128xf32, #tpu.memory_space<vmem>>, %arg4: memref<2x1xf32, #tpu.memory_space<vmem>>) attributes {dimension_semantics = [], scalar_prefetch = 0 : i64, scratch_operands = 0 : i64, tpu.core_type = #tpu.core_type<tc>} {
    %c0 = arith.constant 0 : index
    %c0_0 = arith.constant 0 : index
    %0 = vector.load %arg0[%c0, %c0_0] : memref<16x8xf32, #tpu.memory_space<vmem>>, vector<16x8xf32>
    %c0_1 = arith.constant 0 : index
    %c0_2 = arith.constant 0 : index
    %1 = vector.load %arg1[%c0_1, %c0_2] : memref<16x16xf32, #tpu.memory_space<vmem>>, vector<16x16xf32>
    %c0_3 = arith.constant 0 : index
    %c0_4 = arith.constant 0 : index
    %2 = vector.load %arg3[%c0_3, %c0_4] : memref<304x128xf32, #tpu.memory_space<vmem>>, vector<8x128xf32>
    %cst = arith.constant dense<0.000000e+00> : vector<16x128xf32>
    %3 = tpu.matmul %0, %2, %cst {dimension_numbers = #tpu.dot_dimension_numbers<[1], [0], [0], [1], [0, 0, 1, 1], [], []>} : vector<16x8xf32>, vector<8x128xf32>, vector<16x128xf32> -> vector<16x128xf32>
    %c8 = arith.constant 8 : index
    %c0_5 = arith.constant 0 : index
    %4 = vector.load %arg3[%c8, %c0_5] : memref<304x128xf32, #tpu.memory_space<vmem>>, vector<1x128xf32>
    %5 = vector.broadcast %4 : vector<1x128xf32> to vector<16x128xf32>
    %6 = arith.addf %3, %5 : vector<16x128xf32>
    %c24 = arith.constant 24 : index
    %c0_6 = arith.constant 0 : index
    %7 = vector.load %arg3[%c24, %c0_6] : memref<304x128xf32, #tpu.memory_space<vmem>>, vector<64x128xf32>
    %c88 = arith.constant 88 : index
    %c0_7 = arith.constant 0 : index
    %8 = vector.load %arg3[%c88, %c0_7] : memref<304x128xf32, #tpu.memory_space<vmem>>, vector<64x128xf32>
    %9 = tpu.concatenate %6, %6, %6, %6 in 0 : vector<16x128xf32>, vector<16x128xf32>, vector<16x128xf32>, vector<16x128xf32> -> vector<64x128xf32>
    %10 = tpu.concatenate %1, %1, %1, %1 in 0 : vector<16x16xf32>, vector<16x16xf32>, vector<16x16xf32>, vector<16x16xf32> -> vector<64x16xf32>
    %11 = arith.mulf %9, %8 : vector<64x128xf32>
    %cst_8 = arith.constant dense<0.000000e+00> : vector<64xf32>
    %12 = vector.multi_reduction <add>, %11, %cst_8 [1] : vector<64x128xf32> to vector<64xf32>
    %13 = vector.shape_cast %12 : vector<64xf32> to vector<64x1xf32>
    %cst_9 = arith.constant dense<0.000000e+00> : vector<64x16xf32>
    %14 = tpu.matmul %7, %6, %cst_9 {dimension_numbers = #tpu.dot_dimension_numbers<[1], [1], [0], [0], [0, 0, 1, 0], [], []>} : vector<64x128xf32>, vector<16x128xf32>, vector<64x16xf32> -> vector<64x16xf32>
    %15 = vector.broadcast %13 : vector<64x1xf32> to vector<64x16xf32>
    %16 = arith.addf %15, %14 : vector<64x16xf32>
    %cst_10 = arith.constant 0.000000e+00 : f32
    %17 = vector.broadcast %cst_10 : f32 to vector<64x16xf32>
    %18 = arith.cmpf ogt, %16, %17 : vector<64x16xf32>
    %cst_11 = arith.constant 2.000000e-01 : f32
    %19 = vector.broadcast %cst_11 : f32 to vector<64x16xf32>
    %20 = arith.mulf %19, %16 : vector<64x16xf32>
    %21 = arith.select %18, %16, %20 : vector<64x16xi1>, vector<64x16xf32>
    %cst_12 = arith.constant dense<0xFF800000> : vector<64xf32>
    %22 = vector.multi_reduction <maximumf>, %21, %cst_12 [1] : vector<64x16xf32> to vector<64xf32>
    %23 = vector.shape_cast %22 : vector<64xf32> to vector<64x1xf32>
    %24 = vector.broadcast %23 : vector<64x1xf32> to vector<64x16xf32>
    %25 = arith.subf %21, %24 : vector<64x16xf32>
    %26 = math.exp %25 : vector<64x16xf32>
    %27 = arith.mulf %26, %10 : vector<64x16xf32>
    %cst_13 = arith.constant dense<0.000000e+00> : vector<64xf32>
    %28 = vector.multi_reduction <add>, %27, %cst_13 [1] : vector<64x16xf32> to vector<64xf32>
    %29 = vector.shape_cast %28 : vector<64xf32> to vector<64x1xf32>
    %cst_14 = arith.constant 1.000000e-30 : f32
    %30 = vector.broadcast %cst_14 : f32 to vector<64x1xf32>
    %31 = arith.maximumf %29, %30 : vector<64x1xf32>
    %32 = tpu.reciprocal %31 {approx = true} : vector<64x1xf32> -> vector<64x1xf32>
    %33 = vector.broadcast %32 : vector<64x1xf32> to vector<64x16xf32>
    %34 = arith.mulf %27, %33 : vector<64x16xf32>
    %cst_15 = arith.constant dense<0.000000e+00> : vector<64x128xf32>
    %35 = tpu.matmul %34, %6, %cst_15 {dimension_numbers = #tpu.dot_dimension_numbers<[1], [0], [0], [1], [0, 0, 1, 1], [], []>} : vector<64x16xf32>, vector<16x128xf32>, vector<64x128xf32> -> vector<64x128xf32>
    %c216 = arith.constant 216 : index
    %c0_16 = arith.constant 0 : index
    %36 = vector.load %arg3[%c216, %c0_16] : memref<304x128xf32, #tpu.memory_space<vmem>>, vector<16x64xf32>
    %c152 = arith.constant 152 : index
    %c0_17 = arith.constant 0 : index
    %37 = vector.load %arg3[%c152, %c0_17] : memref<304x128xf32, #tpu.memory_space<vmem>>, vector<64x128xf32>
    %38 = arith.mulf %35, %37 : vector<64x128xf32>
    %cst_18 = arith.constant dense<0.000000e+00> : vector<16x128xf32>
    %39 = tpu.matmul %36, %38, %cst_18 {dimension_numbers = #tpu.dot_dimension_numbers<[1], [0], [0], [1], [0, 0, 1, 1], [], []>} : vector<16x64xf32>, vector<64x128xf32>, vector<16x128xf32> -> vector<16x128xf32>
    %c16 = arith.constant 16 : index
    %c0_19 = arith.constant 0 : index
    %40 = vector.load %arg3[%c16, %c0_19] : memref<304x128xf32, #tpu.memory_space<vmem>>, vector<1x128xf32>
    %41 = vector.broadcast %40 : vector<1x128xf32> to vector<16x128xf32>
    %42 = arith.addf %39, %41 : vector<16x128xf32>
    %cst_20 = arith.constant 0.000000e+00 : f32
    %43 = vector.broadcast %cst_20 : f32 to vector<16x128xf32>
    %44 = arith.cmpf ogt, %42, %43 : vector<16x128xf32>
    %45 = math.exp %42 : vector<16x128xf32>
    %cst_21 = arith.constant 1.000000e+00 : f32
    %46 = vector.broadcast %cst_21 : f32 to vector<16x128xf32>
    %47 = arith.subf %45, %46 : vector<16x128xf32>
    %48 = arith.select %44, %42, %47 : vector<16x128xi1>, vector<16x128xf32>
    %c232 = arith.constant 232 : index
    %c0_22 = arith.constant 0 : index
    %49 = vector.load %arg3[%c232, %c0_22] : memref<304x128xf32, #tpu.memory_space<vmem>>, vector<16x128xf32>
    %cst_23 = arith.constant dense<0.000000e+00> : vector<16x16xf32>
    %50 = tpu.matmul %48, %49, %cst_23 {dimension_numbers = #tpu.dot_dimension_numbers<[1], [1], [0], [0], [0, 0, 1, 0], [], []>} : vector<16x128xf32>, vector<16x128xf32>, vector<16x16xf32> -> vector<16x16xf32>
    %c248 = arith.constant 248 : index
    %c0_24 = arith.constant 0 : index
    %51 = vector.load %arg3[%c248, %c0_24] : memref<304x128xf32, #tpu.memory_space<vmem>>, vector<16x16xf32>
    %c264 = arith.constant 264 : index
    %c0_25 = arith.constant 0 : index
    %52 = vector.load %arg3[%c264, %c0_25] : memref<304x128xf32, #tpu.memory_space<vmem>>, vector<16x16xf32>
    %53 = arith.mulf %50, %52 : vector<16x16xf32>
    %cst_26 = arith.constant dense<0.000000e+00> : vector<16xf32>
    %54 = vector.multi_reduction <add>, %53, %cst_26 [1] : vector<16x16xf32> to vector<16xf32>
    %55 = vector.shape_cast %54 : vector<16xf32> to vector<16x1xf32>
    %cst_27 = arith.constant dense<0.000000e+00> : vector<16x16xf32>
    %56 = tpu.matmul %51, %50, %cst_27 {dimension_numbers = #tpu.dot_dimension_numbers<[1], [1], [0], [0], [0, 0, 1, 0], [], []>} : vector<16x16xf32>, vector<16x16xf32>, vector<16x16xf32> -> vector<16x16xf32>
    %57 = vector.broadcast %55 : vector<16x1xf32> to vector<16x16xf32>
    %58 = arith.addf %57, %56 : vector<16x16xf32>
    %cst_28 = arith.constant 0.000000e+00 : f32
    %59 = vector.broadcast %cst_28 : f32 to vector<16x16xf32>
    %60 = arith.cmpf ogt, %58, %59 : vector<16x16xf32>
    %cst_29 = arith.constant 2.000000e-01 : f32
    %61 = vector.broadcast %cst_29 : f32 to vector<16x16xf32>
    %62 = arith.mulf %61, %58 : vector<16x16xf32>
    %63 = arith.select %60, %58, %62 : vector<16x16xi1>, vector<16x16xf32>
    %cst_30 = arith.constant dense<0xFF800000> : vector<16xf32>
    %64 = vector.multi_reduction <maximumf>, %63, %cst_30 [1] : vector<16x16xf32> to vector<16xf32>
    %65 = vector.shape_cast %64 : vector<16xf32> to vector<16x1xf32>
    %66 = vector.broadcast %65 : vector<16x1xf32> to vector<16x16xf32>
    %67 = arith.subf %63, %66 : vector<16x16xf32>
    %68 = math.exp %67 : vector<16x16xf32>
    %69 = arith.mulf %68, %1 : vector<16x16xf32>
    %cst_31 = arith.constant dense<0.000000e+00> : vector<16xf32>
    %70 = vector.multi_reduction <add>, %69, %cst_31 [1] : vector<16x16xf32> to vector<16xf32>
    %71 = vector.shape_cast %70 : vector<16xf32> to vector<16x1xf32>
    %cst_32 = arith.constant 1.000000e-30 : f32
    %72 = vector.broadcast %cst_32 : f32 to vector<16x1xf32>
    %73 = arith.maximumf %71, %72 : vector<16x1xf32>
    %74 = tpu.reciprocal %73 {approx = true} : vector<16x1xf32> -> vector<16x1xf32>
    %75 = vector.broadcast %74 : vector<16x1xf32> to vector<16x16xf32>
    %76 = arith.mulf %69, %75 : vector<16x16xf32>
    %cst_33 = arith.constant dense<0.000000e+00> : vector<16x16xf32>
    %77 = tpu.matmul %76, %50, %cst_33 {dimension_numbers = #tpu.dot_dimension_numbers<[1], [0], [0], [1], [0, 0, 1, 1], [], []>} : vector<16x16xf32>, vector<16x16xf32>, vector<16x16xf32> -> vector<16x16xf32>
    %c280 = arith.constant 280 : index
    %c0_34 = arith.constant 0 : index
    %78 = vector.load %arg3[%c280, %c0_34] : memref<304x128xf32, #tpu.memory_space<vmem>>, vector<1x16xf32>
    %79 = vector.broadcast %78 : vector<1x16xf32> to vector<16x16xf32>
    %80 = arith.addf %77, %79 : vector<16x16xf32>
    %c0_35 = arith.constant 0 : index
    %c0_36 = arith.constant 0 : index
    %81 = vector.load %arg2[%c0_35, %c0_36] : memref<2x16xf32, #tpu.memory_space<vmem>>, vector<2x16xf32>
    %cst_37 = arith.constant dense<0.000000e+00> : vector<2x16xf32>
    %82 = tpu.matmul %81, %80, %cst_37 {dimension_numbers = #tpu.dot_dimension_numbers<[1], [0], [0], [1], [0, 0, 1, 1], [], []>} : vector<2x16xf32>, vector<16x16xf32>, vector<2x16xf32> -> vector<2x16xf32>
    %cst_38 = arith.constant 0.000000e+00 : f32
    %83 = vector.broadcast %cst_38 : f32 to vector<2x16xf32>
    %84 = arith.maximumf %82, %83 : vector<2x16xf32>
    %c288 = arith.constant 288 : index
    %c0_39 = arith.constant 0 : index
    %85 = vector.load %arg3[%c288, %c0_39] : memref<304x128xf32, #tpu.memory_space<vmem>>, vector<1x16xf32>
    %86 = vector.broadcast %85 : vector<1x16xf32> to vector<2x16xf32>
    %87 = arith.mulf %84, %86 : vector<2x16xf32>
    %cst_40 = arith.constant dense<0.000000e+00> : vector<2xf32>
    %88 = vector.multi_reduction <add>, %87, %cst_40 [1] : vector<2x16xf32> to vector<2xf32>
    %89 = vector.shape_cast %88 : vector<2xf32> to vector<2x1xf32>
    %c296 = arith.constant 296 : index
    %c0_41 = arith.constant 0 : index
    %90 = vector.load %arg3[%c296, %c0_41] : memref<304x128xf32, #tpu.memory_space<vmem>>, vector<1x1xf32>
    %91 = vector.broadcast %90 : vector<1x1xf32> to vector<2x1xf32>
    %92 = arith.addf %89, %91 : vector<2x1xf32>
    %c0_42 = arith.constant 0 : index
    %c0_43 = arith.constant 0 : index
    %93 = vector.load %arg4[%c0_42, %c0_43] : memref<2x1xf32, #tpu.memory_space<vmem>>, vector<2x1xf32>
    tpu.vector_store %arg4[%c0_42, %c0_43], %92 {strides = array<i32>} : memref<2x1xf32, #tpu.memory_space<vmem>>, vector<2x1xf32>,
    return
  }
}

</mosaic_0001>

<llo_original>
// kernel: net_forward.1
$region0: #{net_forward.1}
  #allocation0 [shape = 'u32[]', space=smem, size = 0x4, offset = 0x4, fixed_abs, tag = 'smem constant byte address 0x4 - core index']
  #allocation1 [shape = 'u32[144,128]{1,0:T(1,128)}', space=vmem, size = 0x12000, scoped, tag = 'internal scratch']
  %s0 = inlined_call_operand.vmem [shape: f32[16,8], index: 0, kind: input, shape index: {}]
  %s1 = inlined_call_operand.vmem [shape: f32[16,16], index: 1, kind: input, shape index: {}]
  %s2 = inlined_call_operand.vmem [shape: f32[2,16], index: 2, kind: input, shape index: {}]
  %s3 = inlined_call_operand.hbm [shape: f32[304,128], index: 3, kind: input, shape index: {}]
  %s4 = inlined_call_operand.vmem [shape: f32[2,1], index: 4, kind: output, shape index: {}]
  %s5 = sld [smem:[#allocation0]]
  $region30: #{net_forward.1} parent=0
    _
  %s7 = ssub.s32 1, %s5
  %s8 = scalar_select 0, %s7, %s5
  $region1: #{net_forward.1} parent=0
    #allocation2 [shape = 'u8[155648]{0}', space=vmem, size = 0x26000, scoped, tag = 'input window, operand 3, single buffered']
    #allocation3 [shape = 's32[1]{0}', space=sflag, size = 0x4, scoped, tag = 'scoped memory for net_forward.1']
    %9 = vsyncpa [#allocation3], 0
    // Predicated region
    $region2: #{net_forward.1} parent=1 // pred_check
      _
    $region3: #{net_forward.1} parent=1 // pred_check_branch
      %11 = sbr.rel (0) target = $region5
    $region4: #{net_forward.1} parent=1 // pred_region
      _
    $region5: #{net_forward.1} parent=1 // pred_fallthru
      _
    // Predicated region
    $region6: #{net_forward.1} parent=1 // pred_check
      _
    $region7: #{net_forward.1} parent=1 // pred_check_branch
      %13 = sbr.rel (0) target = $region9
    $region8: #{net_forward.1} parent=1 // pred_region
      _
    $region9: #{net_forward.1} parent=1 // pred_fallthru
      _
    // Predicated region
    $region10: #{net_forward.1} parent=1 // pred_check
      _
    $region11: #{net_forward.1} parent=1 // pred_check_branch
      %15 = sbr.rel (0) target = $region13
    $region12: #{net_forward.1} parent=1 // pred_region
      _
    $region13: #{net_forward.1} parent=1 // pred_fallthru
      _
    // Predicated region
    $region14: #{net_forward.1} parent=1 // pred_check
      _
    $region15: #{net_forward.1} parent=1 // pred_check_branch
      %17 = sbr.rel (0) target = $region17
    $region16: #{net_forward.1} parent=1 // pred_region
      %s19 = ssub.s32 4864, 4864
      %20 = vsyncadd [#allocation3], %s19
      %s21 = sshll.u32 [#allocation2], 4
      %s22 = int_to_ptr.vmem [resolvable:$true] %s21
      %27 = dma.hbm_to_vmem [thread:$0]  %s3, 4864, %s22, [#allocation3], 128, 128, 8
    $region17: #{net_forward.1} parent=1 // pred_fallthru
      _
    // Predicated region
    $region18: #{net_forward.1} parent=1 // pred_check
      _
    $region19: #{net_forward.1} parent=1 // pred_check_branch
      %29 = sbr.rel (0) target = $region21
    $region20: #{net_forward.1} parent=1 // pred_region
      %30 = dma.done [#allocation3], 4864
    $region21: #{net_forward.1} parent=1 // pred_fallthru
      _
    %v31 = vld [vmem:[%s0] sm:$0xff]
    %v32 = vld [vmem:[%s0 + $0x8] sm:$0xff]
    %v33 = vld [vmem:[%s1] sm:$0xff]
    %v34 = vld [vmem:[%s1 + $0x8] sm:$0xff]
    %v35 = vld [vmem:[#allocation2] sm:$0xff]
    %v36 = vld [vmem:[#allocation2 + $0x8] sm:$0x1]
    %v37 = vlaneseq
    %v38 = vshrl.u32 %v37, 7
    %v39 = vsub.s32 0, %v38
    %v40 = vrot.slane %v36, %v39
    %vm41 = vcmask 64512
    %v43 = vsel %vm41, %v31, 0
    %v46 = vsel %vm41, %v32, 0
    %48 = vmatprep.subr.mxu0 0.0
    %49 = vmatpush1.msra.mxu0 0.0
    %50 = vmatprep.subr.mxu0 0.0
    %51 = vmatpush1.msra.mxu0 0.0
    %52 = vmatprep.subr.mxu0 0.0
    %53 = vmatpush1.msra.mxu0 0.0
    %54 = vmatprep.subr.mxu0 0.0
    %55 = vmatpush1.msra.mxu0 0.0
    %56 = vmatprep.subr.mxu0 0.0
    %57 = vmatpush1.msra.mxu0 0.0
    %58 = vmatprep.subr.mxu0 0.0
    %59 = vmatpush1.msra.mxu0 0.0
    %60 = vmatprep.subr.mxu0 0.0
    %61 = vmatpush1.msra.mxu0 0.0
    %62 = vmatprep.subr.mxu0 0.0
    %63 = vmatpush1.msra.mxu0 0.0
    %64 = vmatprep.subr.mxu0 0.0
    %65 = vmatpush1.msra.mxu0 0.0
    %66 = vmatprep.subr.mxu0 0.0
    %67 = vmatpush1.msra.mxu0 0.0
    %68 = vmatprep.subr.mxu0 0.0
    %69 = vmatpush1.msra.mxu0 0.0
    %70 = vmatprep.subr.mxu0 0.0
    %71 = vmatpush1.msra.mxu0 0.0
    %72 = vmatprep.subr.mxu0 0.0
    %73 = vmatpush1.msra.mxu0 0.0
    %74 = vmatprep.subr.mxu0 0.0
    %75 = vmatpush1.msra.mxu0 0.0
    %76 = vmatprep.subr.mxu0 0.0
    %77 = vmatpush1.msra.mxu0 0.0
    %78 = vmatprep.subr.mxu0 0.0
    %79 = vmatpush1.msra.mxu0 %v35
    %80 = vmatprep.subr.mxu0 0.0
    %81 = vmatpush2.msra.mxu0 0.0
    %82 = vmatprep.subr.mxu0 0.0
    %83 = vmatpush2.msra.mxu0 0.0
    %84 = vmatprep.subr.mxu0 0.0
    %85 = vmatpush2.msra.mxu0 0.0
    %86 = vmatprep.subr.mxu0 0.0
    %87 = vmatpush2.msra.mxu0 0.0
    %88 = vmatprep.subr.mxu0 0.0
    %89 = vmatpush2.msra.mxu0 0.0
    %90 = vmatprep.subr.mxu0 0.0
    %91 = vmatpush2.msra.mxu0 0.0
    %92 = vmatprep.subr.mxu0 0.0
    %93 = vmatpush2.msra.mxu0 0.0
    %94 = vmatprep.subr.mxu0 0.0
    %95 = vmatpush2.msra.mxu0 0.0
    %96 = vmatprep.subr.mxu0 0.0
    %97 = vmatpush2.msra.mxu0 0.0
    %98 = vmatprep.subr.mxu0 0.0
    %99 = vmatpush2.msra.mxu0 0.0
    %100 = vmatprep.subr.mxu0 0.0
    %101 = vmatpush2.msra.mxu0 0.0
    %102 = vmatprep.subr.mxu0 0.0
    %103 = vmatpush2.msra.mxu0 0.0
    %104 = vmatprep.subr.mxu0 0.0
    %105 = vmatpush2.msra.mxu0 0.0
    %106 = vmatprep.subr.mxu0 0.0
    %107 = vmatpush2.msra.mxu0 0.0
    %108 = vmatprep.subr.mxu0 0.0
    %109 = vmatpush2.msra.mxu0 0.0
    %110 = vmatprep.subr.mxu0 0.0
    %111 = vmatpush2.msra.mxu0 0.0
    %112 = vmatprep.mubr.f32.mxu0 0.0
    %113 = vmatmul.mubr.f32.gmra.mxu0 %v43
    %v114 = vpop.f32.mrf.mxu0
    %v115 = vadd.f32 %v40, %v114
    %v116 = vpop.f32.mrf.mxu0
    %117 = vmatprep.mubr.f32.mxu0 0.0
    %118 = vmatmul.mubr.f32.gmra.mxu0 %v46
    %v119 = vpop.f32.mrf.mxu0
    %v120 = vadd.f32 %v40, %v119
    %v121 = vpop.f32.mrf.mxu0
    %122 = vdwg.mxu0
    %v123 = vld [vmem:[#allocation2 + $0x18] sm:$0xff]
    %v124 = vld [vmem:[#allocation2 + $0x20] sm:$0xff]
    %v125 = vld [vmem:[#allocation2 + $0x28] sm:$0xff]
    %v126 = vld [vmem:[#allocation2 + $0x30] sm:$0xff]
    %v127 = vld [vmem:[#allocation2 + $0x38] sm:$0xff]
    %v128 = vld [vmem:[#allocation2 + $0x40] sm:$0xff]
    %v129 = vld [vmem:[#allocation2 + $0x48] sm:$0xff]
    %v130 = vld [vmem:[#allocation2 + $0x50] sm:$0xff]
    %v131 = vld [vmem:[#allocation2 + $0x58] sm:$0xff]
    %v132 = vld [vmem:[#allocation2 + $0x60] sm:$0xff]
    %v133 = vld [vmem:[#allocation2 + $0x68] sm:$0xff]
    %v134 = vld [vmem:[#allocation2 + $0x70] sm:$0xff]
    %v135 = vld [vmem:[#allocation2 + $0x78] sm:$0xff]
    %v136 = vld [vmem:[#allocation2 + $0x80] sm:$0xff]
    %v137 = vld [vmem:[#allocation2 + $0x88] sm:$0xff]
    %v138 = vld [vmem:[#allocation2 + $0x90] sm:$0xff]
    %v139 = vmul.f32 %v115, %v131
    %v140 = vmul.f32 %v120, %v132
    %v141 = vmul.f32 %v115, %v133
    %v142 = vmul.f32 %v120, %v134
    %v143 = vmul.f32 %v115, %v135
    %v144 = vmul.f32 %v120, %v136
    %v145 = vmul.f32 %v115, %v137
    %v146 = vmul.f32 %v120, %v138
    %147 = vadd.xlane.f32.xlu0 %v139
    %v148 = vpop.xlane.xlu0 %147
    %149 = vadd.xlane.f32.xlu0 %v140
    %v150 = vpop.xlane.xlu0 %149
    %151 = vadd.xlane.f32.xlu0 %v141
    %v152 = vpop.xlane.xlu0 %151
    %153 = vadd.xlane.f32.xlu0 %v142
    %v154 = vpop.xlane.xlu0 %153
    %155 = vadd.xlane.f32.xlu0 %v143
    %v156 = vpop.xlane.xlu0 %155
    %157 = vadd.xlane.f32.xlu0 %v144
    %v158 = vpop.xlane.xlu0 %157
    %159 = vadd.xlane.f32.xlu0 %v145
    %v160 = vpop.xlane.xlu0 %159
    %161 = vadd.xlane.f32.xlu0 %v146
    %v162 = vpop.xlane.xlu0 %161
    %163 = vmatprep.subr.mxu0 0.0
    %164 = vmatpush1.xpose.msra.mxu0 0.0
    %165 = vmatprep.subr.mxu0 0.0
    %166 = vmatpush1.xpose.msra.mxu0 0.0
    %167 = vmatprep.subr.mxu0 0.0
    %168 = vmatpush1.xpose.msra.mxu0 0.0
    %169 = vmatprep.subr.mxu0 0.0
    %170 = vmatpush1.xpose.msra.mxu0 0.0
    %171 = vmatprep.subr.mxu0 0.0
    %172 = vmatpush1.xpose.msra.mxu0 0.0
    %173 = vmatprep.subr.mxu0 0.0
    %174 = vmatpush1.xpose.msra.mxu0 0.0
    %175 = vmatprep.subr.mxu0 0.0
    %176 = vmatpush1.xpose.msra.mxu0 0.0
    %177 = vmatprep.subr.mxu0 0.0
    %178 = vmatpush1.xpose.msra.mxu0 0.0
    %179 = vmatprep.subr.mxu0 0.0
    %180 = vmatpush1.xpose.msra.mxu0 0.0
    %181 = vmatprep.subr.mxu0 0.0
    %182 = vmatpush1.xpose.msra.mxu0 0.0
    %183 = vmatprep.subr.mxu0 0.0
    %184 = vmatpush1.xpose.msra.mxu0 0.0
    %185 = vmatprep.subr.mxu0 0.0
    %186 = vmatpush1.xpose.msra.mxu0 0.0
    %187 = vmatprep.subr.mxu0 0.0
    %188 = vmatpush1.xpose.msra.mxu0 0.0
    %189 = vmatprep.subr.mxu0 0.0
    %190 = vmatpush1.xpose.msra.mxu0 0.0
    %191 = vmatprep.subr.mxu0 0.0
    %192 = vmatpush1.xpose.msra.mxu0 %v120
    %193 = vmatprep.subr.mxu0 0.0
    %194 = vmatpush1.xpose.msra.mxu0 %v115
    %195 = vmatprep.subr.mxu0 0.0
    %196 = vmatpush2.xpose.msra.mxu0 0.0
    %197 = vmatprep.subr.mxu0 0.0
    %198 = vmatpush2.xpose.msra.mxu0 0.0
    %199 = vmatprep.subr.mxu0 0.0
    %200 = vmatpush2.xpose.msra.mxu0 0.0
    %201 = vmatprep.subr.mxu0 0.0
    %202 = vmatpush2.xpose.msra.mxu0 0.0
    %203 = vmatprep.subr.mxu0 0.0
    %204 = vmatpush2.xpose.msra.mxu0 0.0
    %205 = vmatprep.subr.mxu0 0.0
    %206 = vmatpush2.xpose.msra.mxu0 0.0
    %207 = vmatprep.subr.mxu0 0.0
    %208 = vmatpush2.xpose.msra.mxu0 0.0
    %209 = vmatprep.subr.mxu0 0.0
    %210 = vmatpush2.xpose.msra.mxu0 0.0
    %211 = vmatprep.subr.mxu0 0.0
    %212 = vmatpush2.xpose.msra.mxu0 0.0
    %213 = vmatprep.subr.mxu0 0.0
    %214 = vmatpush2.xpose.msra.mxu0 0.0
    %215 = vmatprep.subr.mxu0 0.0
    %216 = vmatpush2.xpose.msra.mxu0 0.0
    %217 = vmatprep.subr.mxu0 0.0
    %218 = vmatpush2.xpose.msra.mxu0 0.0
    %219 = vmatprep.subr.mxu0 0.0
    %220 = vmatpush2.xpose.msra.mxu0 0.0
    %221 = vmatprep.subr.mxu0 0.0
    %222 = vmatpush2.xpose.msra.mxu0 0.0
    %223 = vmatprep.subr.mxu0 0.0
    %224 = vmatpush2.xpose.msra.mxu0 0.0
    %225 = vmatprep.subr.mxu0 0.0
    %226 = vmatpush2.xpose.msra.mxu0 0.0
    %227 = vmatprep.mubr.f32.mxu0 0.0
    %228 = vmatmul.mubr.f32.gmra.mxu0 %v123
    %v229 = vpop.f32.mrf.mxu0
    %v230 = vadd.f32 0.0, %v229
    %v231 = vpop.f32.mrf.mxu0
    %232 = vmatprep.mubr.f32.mxu0 0.0
    %233 = vmatmul.mubr.f32.gmra.mxu0 %v124
    %v234 = vpop.f32.mrf.mxu0
    %v235 = vadd.f32 0.0, %v234
    %v236 = vpop.f32.mrf.mxu0
    %237 = vmatprep.mubr.f32.mxu0 0.0
    %238 = vmatmul.mubr.f32.gmra.mxu0 %v125
    %v239 = vpop.f32.mrf.mxu0
    %v240 = vadd.f32 0.0, %v239
    %v241 = vpop.f32.mrf.mxu0
    %242 = vmatprep.mubr.f32.mxu0 0.0
    %243 = vmatmul.mubr.f32.gmra.mxu0 %v126
    %v244 = vpop.f32.mrf.mxu0
    %v245 = vadd.f32 0.0, %v244
    %v246 = vpop.f32.mrf.mxu0
    %247 = vmatprep.mubr.f32.mxu0 0.0
    %248 = vmatmul.mubr.f32.gmra.mxu0 %v127
    %v249 = vpop.f32.mrf.mxu0
    %v250 = vadd.f32 0.0, %v249
    %v251 = vpop.f32.mrf.mxu0
    %252 = vmatprep.mubr.f32.mxu0 0.0
    %253 = vmatmul.mubr.f32.gmra.mxu0 %v128
    %v254 = vpop.f32.mrf.mxu0
    %v255 = vadd.f32 0.0, %v254
    %v256 = vpop.f32.mrf.mxu0
    %257 = vmatprep.mubr.f32.mxu0 0.0
    %258 = vmatmul.mubr.f32.gmra.mxu0 %v129
    %v259 = vpop.f32.mrf.mxu0
    %v260 = vadd.f32 0.0, %v259
    %v261 = vpop.f32.mrf.mxu0
    %262 = vmatprep.mubr.f32.mxu0 0.0
    %263 = vmatmul.mubr.f32.gmra.mxu0 %v130
    %v264 = vpop.f32.mrf.mxu0
    %v265 = vadd.f32 0.0, %v264
    %v266 = vpop.f32.mrf.mxu0
    %267 = vdwg.mxu0
    %v268 = vadd.f32 %v148, %v230
    %v269 = vadd.f32 %v150, %v235
    %v270 = vadd.f32 %v152, %v240
    %v271 = vadd.f32 %v154, %v245
    %v272 = vadd.f32 %v156, %v250
    %v273 = vadd.f32 %v158, %v255
    %v274 = vadd.f32 %v160, %v260
    %v275 = vadd.f32 %v162, %v265
    %vm276 = vcmp.gt.f32.partialorder %v268, 0.0
    %vm277 = vcmp.gt.f32.partialorder %v269, 0.0
    %vm278 = vcmp.gt.f32.partialorder %v270, 0.0
    %vm279 = vcmp.gt.f32.partialorder %v271, 0.0
    %vm280 = vcmp.gt.f32.partialorder %v272, 0.0
    %vm281 = vcmp.gt.f32.partialorder %v273, 0.0
    %vm282 = vcmp.gt.f32.partialorder %v274, 0.0
    %vm283 = vcmp.gt.f32.partialorder %v275, 0.0
    %v284 = vmul.f32 %v268, 0.2
    %v285 = vmul.f32 %v269, 0.2
    %v286 = vmul.f32 %v270, 0.2
    %v287 = vmul.f32 %v271, 0.2
    %v288 = vmul.f32 %v272, 0.2
    %v289 = vmul.f32 %v273, 0.2
    %v290 = vmul.f32 %v274, 0.2
    %v291 = vmul.f32 %v275, 0.2
    %v292 = vsel %vm276, %v268, %v284
    %v293 = vsel %vm277, %v269, %v285
    %v294 = vsel %vm278, %v270, %v286
    %v295 = vsel %vm279, %v271, %v287
    %v296 = vsel %vm280, %v272, %v288
    %v297 = vsel %vm281, %v273, %v289
    %v298 = vsel %vm282, %v274, %v290
    %v299 = vsel %vm283, %v275, %v291
    %vm300 = vcmask 130048
    %v301 = vsel %vm300, %v292, -inf
    %302 = vmax.xlane.f32.xlu0 %v301
    %v303 = vpop.xlane.xlu0 %302
    %v304 = vsel %vm300, %v293, -inf
    %305 = vmax.xlane.f32.xlu0 %v304
    %v306 = vpop.xlane.xlu0 %305
    %v307 = vsel %vm300, %v294, -inf
    %308 = vmax.xlane.f32.xlu0 %v307
    %v309 = vpop.xlane.xlu0 %308
    %v310 = vsel %vm300, %v295, -inf
    %311 = vmax.xlane.f32.xlu0 %v310
    %v312 = vpop.xlane.xlu0 %311
    %v313 = vsel %vm300, %v296, -inf
    %314 = vmax.xlane.f32.xlu0 %v313
    %v315 = vpop.xlane.xlu0 %314
    %v316 = vsel %vm300, %v297, -inf
    %317 = vmax.xlane.f32.xlu0 %v316
    %v318 = vpop.xlane.xlu0 %317
    %v319 = vsel %vm300, %v298, -inf
    %320 = vmax.xlane.f32.xlu0 %v319
    %v321 = vpop.xlane.xlu0 %320
    %v322 = vsel %vm300, %v299, -inf
    %323 = vmax.xlane.f32.xlu0 %v322
    %v324 = vpop.xlane.xlu0 %323
    %v325 = vsub.f32 %v292, %v303
    %v326 = vsub.f32 %v293, %v306
    %v327 = vsub.f32 %v294, %v309
    %v328 = vsub.f32 %v295, %v312
    %v329 = vsub.f32 %v296, %v315
    %v330 = vsub.f32 %v297, %v318
    %v331 = vsub.f32 %v298, %v321
    %v332 = vsub.f32 %v299, %v324
    %v333 = vmul.f32 %v325, 1.442695
    %v334 = vpow.pop %v333
    %v335 = vmul.f32 %v326, 1.442695
    %v336 = vpow.pop %v335
    %v337 = vmul.f32 %v327, 1.442695
    %v338 = vpow.pop %v337
    %v339 = vmul.f32 %v328, 1.442695
    %v340 = vpow.pop %v339
    %v341 = vmul.f32 %v329, 1.442695
    %v342 = vpow.pop %v341
    %v343 = vmul.f32 %v330, 1.442695
    %v344 = vpow.pop %v343
    %v345 = vmul.f32 %v331, 1.442695
    %v346 = vpow.pop %v345
    %v347 = vmul.f32 %v332, 1.442695
    %v348 = vpow.pop %v347
    %v349 = vmul.f32 %v334, %v33
    %v350 = vmul.f32 %v336, %v34
    %v351 = vmul.f32 %v338, %v33
    %v352 = vmul.f32 %v340, %v34
    %v353 = vmul.f32 %v342, %v33
    %v354 = vmul.f32 %v344, %v34
    %v355 = vmul.f32 %v346, %v33
    %v356 = vmul.f32 %v348, %v34
    %v357 = vsel %vm300, %v349, 0.0
    %358 = vadd.xlane.f32.xlu0 %v357
    %v359 = vpop.xlane.xlu0 %358
    %v360 = vsel %vm300, %v350, 0.0
    %361 = vadd.xlane.f32.xlu0 %v360
    %v362 = vpop.xlane.xlu0 %361
    %v363 = vsel %vm300, %v351, 0.0
    %364 = vadd.xlane.f32.xlu0 %v363
    %v365 = vpop.xlane.xlu0 %364
    %v366 = vsel %vm300, %v352, 0.0
    %367 = vadd.xlane.f32.xlu0 %v366
    %v368 = vpop.xlane.xlu0 %367
    %v369 = vsel %vm300, %v353, 0.0
    %370 = vadd.xlane.f32.xlu0 %v369
    %v371 = vpop.xlane.xlu0 %370
    %v372 = vsel %vm300, %v354, 0.0
    %373 = vadd.xlane.f32.xlu0 %v372
    %v374 = vpop.xlane.xlu0 %373
    %v375 = vsel %vm300, %v355, 0.0
    %376 = vadd.xlane.f32.xlu0 %v375
    %v377 = vpop.xlane.xlu0 %376
    %v378 = vsel %vm300, %v356, 0.0
    %379 = vadd.xlane.f32.xlu0 %v378
    %v380 = vpop.xlane.xlu0 %379
    %v381 = vmax.f32 %v359, 1e-30
    %v382 = vmax.f32 %v362, 1e-30
    %v383 = vmax.f32 %v365, 1e-30
    %v384 = vmax.f32 %v368, 1e-30
    %v385 = vmax.f32 %v371, 1e-30
    %v386 = vmax.f32 %v374, 1e-30
    %v387 = vmax.f32 %v377, 1e-30
    %v388 = vmax.f32 %v380, 1e-30
    %v389 = vrcp.pop %v381
    %v390 = vrcp.pop %v382
    %v391 = vrcp.pop %v383
    %v392 = vrcp.pop %v384
    %v393 = vrcp.pop %v385
    %v394 = vrcp.pop %v386
    %v395 = vrcp.pop %v387
    %v396 = vrcp.pop %v388
    %v397 = vmul.f32 %v349, %v389
    %v398 = vmul.f32 %v350, %v390
    %v399 = vmul.f32 %v351, %v391
    %v400 = vmul.f32 %v352, %v392
    %v401 = vmul.f32 %v353, %v393
    %v402 = vmul.f32 %v354, %v394
    %v403 = vmul.f32 %v355, %v395
    %v404 = vmul.f32 %v356, %v396
    %v406 = vsel %vm300, %v397, 0
    %v409 = vsel %vm300, %v398, 0
    %v412 = vsel %vm300, %v399, 0
    %v415 = vsel %vm300, %v400, 0
    %v418 = vsel %vm300, %v401, 0
    %v421 = vsel %vm300, %v402, 0
    %v424 = vsel %vm300, %v403, 0
    %v427 = vsel %vm300, %v404, 0
    %429 = vmatprep.subr.mxu0 0.0
    %430 = vmatpush1.msra.mxu0 0.0
    %431 = vmatprep.subr.mxu0 0.0
    %432 = vmatpush1.msra.mxu0 0.0
    %433 = vmatprep.subr.mxu0 0.0
    %434 = vmatpush1.msra.mxu0 0.0
    %435 = vmatprep.subr.mxu0 0.0
    %436 = vmatpush1.msra.mxu0 0.0
    %437 = vmatprep.subr.mxu0 0.0
    %438 = vmatpush1.msra.mxu0 0.0
    %439 = vmatprep.subr.mxu0 0.0
    %440 = vmatpush1.msra.mxu0 0.0
    %441 = vmatprep.subr.mxu0 0.0
    %442 = vmatpush1.msra.mxu0 0.0
    %443 = vmatprep.subr.mxu0 0.0
    %444 = vmatpush1.msra.mxu0 0.0
    %445 = vmatprep.subr.mxu0 0.0
    %446 = vmatpush1.msra.mxu0 0.0
    %447 = vmatprep.subr.mxu0 0.0
    %448 = vmatpush1.msra.mxu0 0.0
    %449 = vmatprep.subr.mxu0 0.0
    %450 = vmatpush1.msra.mxu0 0.0
    %451 = vmatprep.subr.mxu0 0.0
    %452 = vmatpush1.msra.mxu0 0.0
    %453 = vmatprep.subr.mxu0 0.0
    %454 = vmatpush1.msra.mxu0 0.0
    %455 = vmatprep.subr.mxu0 0.0
    %456 = vmatpush1.msra.mxu0 0.0
    %457 = vmatprep.subr.mxu0 0.0
    %458 = vmatpush1.msra.mxu0 %v120
    %459 = vmatprep.subr.mxu0 0.0
    %460 = vmatpush1.msra.mxu0 %v115
    %461 = vmatprep.subr.mxu0 0.0
    %462 = vmatpush2.msra.mxu0 0.0
    %463 = vmatprep.subr.mxu0 0.0
    %464 = vmatpush2.msra.mxu0 0.0
    %465 = vmatprep.subr.mxu0 0.0
    %466 = vmatpush2.msra.mxu0 0.0
    %467 = vmatprep.subr.mxu0 0.0
    %468 = vmatpush2.msra.mxu0 0.0
    %469 = vmatprep.subr.mxu0 0.0
    %470 = vmatpush2.msra.mxu0 0.0
    %471 = vmatprep.subr.mxu0 0.0
    %472 = vmatpush2.msra.mxu0 0.0
    %473 = vmatprep.subr.mxu0 0.0
    %474 = vmatpush2.msra.mxu0 0.0
    %475 = vmatprep.subr.mxu0 0.0
    %476 = vmatpush2.msra.mxu0 0.0
    %477 = vmatprep.subr.mxu0 0.0
    %478 = vmatpush2.msra.mxu0 0.0
    %479 = vmatprep.subr.mxu0 0.0
    %480 = vmatpush2.msra.mxu0 0.0
    %481 = vmatprep.subr.mxu0 0.0
    %482 = vmatpush2.msra.mxu0 0.0
    %483 = vmatprep.subr.mxu0 0.0
    %484 = vmatpush2.msra.mxu0 0.0
    %485 = vmatprep.subr.mxu0 0.0
    %486 = vmatpush2.msra.mxu0 0.0
    %487 = vmatprep.subr.mxu0 0.0
    %488 = vmatpush2.msra.mxu0 0.0
    %489 = vmatprep.subr.mxu0 0.0
    %490 = vmatpush2.msra.mxu0 0.0
    %491 = vmatprep.subr.mxu0 0.0
    %492 = vmatpush2.msra.mxu0 0.0
    %493 = vmatprep.mubr.f32.mxu0 0.0
    %494 = vmatmul.mubr.f32.gmra.mxu0 %v406
    %v495 = vpop.f32.mrf.mxu0
    %v496 = vadd.f32 0.0, %v495
    %v497 = vpop.f32.mrf.mxu0
    %498 = vmatprep.mubr.f32.mxu0 0.0
    %499 = vmatmul.mubr.f32.gmra.mxu0 %v409
    %v500 = vpop.f32.mrf.mxu0
    %v501 = vadd.f32 0.0, %v500
    %v502 = vpop.f32.mrf.mxu0
    %503 = vmatprep.mubr.f32.mxu0 0.0
    %504 = vmatmul.mubr.f32.gmra.mxu0 %v412
    %v505 = vpop.f32.mrf.mxu0
    %v506 = vadd.f32 0.0, %v505
    %v507 = vpop.f32.mrf.mxu0
    %508 = vmatprep.mubr.f32.mxu0 0.0
    %509 = vmatmul.mubr.f32.gmra.mxu0 %v415
    %v510 = vpop.f32.mrf.mxu0
    %v511 = vadd.f32 0.0, %v510
    %v512 = vpop.f32.mrf.mxu0
    %513 = vmatprep.mubr.f32.mxu0 0.0
    %514 = vmatmul.mubr.f32.gmra.mxu0 %v418
    %v515 = vpop.f32.mrf.mxu0
    %v516 = vadd.f32 0.0, %v515
    %v517 = vpop.f32.mrf.mxu0
    %518 = vmatprep.mubr.f32.mxu0 0.0
    %519 = vmatmul.mubr.f32.gmra.mxu0 %v421
    %v520 = vpop.f32.mrf.mxu0
    %v521 = vadd.f32 0.0, %v520
    %v522 = vpop.f32.mrf.mxu0
    %523 = vmatprep.mubr.f32.mxu0 0.0
    %524 = vmatmul.mubr.f32.gmra.mxu0 %v424
    %v525 = vpop.f32.mrf.mxu0
    %v526 = vadd.f32 0.0, %v525
    %v527 = vpop.f32.mrf.mxu0
    %528 = vmatprep.mubr.f32.mxu0 0.0
    %529 = vmatmul.mubr.f32.gmra.mxu0 %v427
    %v530 = vpop.f32.mrf.mxu0
    %v531 = vadd.f32 0.0, %v530
    %v532 = vpop.f32.mrf.mxu0
    %533 = vdwg.mxu0
    %v534 = vld [vmem:[#allocation2 + $0xd8] sm:$0xff]
    %v535 = vld [vmem:[#allocation2 + $0xe0] sm:$0xff]
    %v536 = vld [vmem:[#allocation2 + $0x98] sm:$0xff]
    %v537 = vld [vmem:[#allocation2 + $0xa0] sm:$0xff]
    %v538 = vld [vmem:[#allocation2 + $0xa8] sm:$0xff]
    %v539 = vld [vmem:[#allocation2 + $0xb0] sm:$0xff]
    %v540 = vld [vmem:[#allocation2 + $0xb8] sm:$0xff]
    %v541 = vld [vmem:[#allocation2 + $0xc0] sm:$0xff]
    %v542 = vld [vmem:[#allocation2 + $0xc8] sm:$0xff]
    %v543 = vld [vmem:[#allocation2 + $0xd0] sm:$0xff]
    %v544 = vmul.f32 %v496, %v536
    %v545 = vmul.f32 %v501, %v537
    %v546 = vmul.f32 %v506, %v538
    %v547 = vmul.f32 %v511, %v539
    %v548 = vmul.f32 %v516, %v540
    %v549 = vmul.f32 %v521, %v541
    %v550 = vmul.f32 %v526, %v542
    %v551 = vmul.f32 %v531, %v543
    %v552 = vld [vmem:[#allocation2 + $0x10] sm:$0x1]
    %v553 = vlaneseq
    %v554 = vshrl.u32 %v553, 7
    %v555 = vsub.s32 0, %v554
    %v556 = vrot.slane %v552, %v555
    %vm557 = vcmask 523264
    %v559 = vsel %vm557, %v534, 0
    %v562 = vsel %vm557, %v535, 0
    %564 = vmatprep.subr.mxu0 0.0
    %565 = vmatpush1.msra.mxu0 0.0
    %566 = vmatprep.subr.mxu0 0.0
    %567 = vmatpush1.msra.mxu0 0.0
    %568 = vmatprep.subr.mxu0 0.0
    %569 = vmatpush1.msra.mxu0 0.0
    %570 = vmatprep.subr.mxu0 0.0
    %571 = vmatpush1.msra.mxu0 0.0
    %572 = vmatprep.subr.mxu0 0.0
    %573 = vmatpush1.msra.mxu0 0.0
    %574 = vmatprep.subr.mxu0 0.0
    %575 = vmatpush1.msra.mxu0 0.0
    %576 = vmatprep.subr.mxu0 0.0
    %577 = vmatpush1.msra.mxu0 0.0
    %578 = vmatprep.subr.mxu0 0.0
    %579 = vmatpush1.msra.mxu0 0.0
    %580 = vmatprep.subr.mxu0 0.0
    %581 = vmatpush1.msra.mxu0 %v551
    %582 = vmatprep.subr.mxu0 0.0
    %583 = vmatpush1.msra.mxu0 %v550
    %584 = vmatprep.subr.mxu0 0.0
    %585 = vmatpush1.msra.mxu0 %v549
    %586 = vmatprep.subr.mxu0 0.0
    %587 = vmatpush1.msra.mxu0 %v548
    %588 = vmatprep.subr.mxu0 0.0
    %589 = vmatpush1.msra.mxu0 %v547
    %590 = vmatprep.subr.mxu0 0.0
    %591 = vmatpush1.msra.mxu0 %v546
    %592 = vmatprep.subr.mxu0 0.0
    %593 = vmatpush1.msra.mxu0 %v545
    %594 = vmatprep.subr.mxu0 0.0
    %595 = vmatpush1.msra.mxu0 %v544
    %596 = vmatprep.subr.mxu0 0.0
    %597 = vmatpush2.msra.mxu0 0.0
    %598 = vmatprep.subr.mxu0 0.0
    %599 = vmatpush2.msra.mxu0 0.0
    %600 = vmatprep.subr.mxu0 0.0
    %601 = vmatpush2.msra.mxu0 0.0
    %602 = vmatprep.subr.mxu0 0.0
    %603 = vmatpush2.msra.mxu0 0.0
    %604 = vmatprep.subr.mxu0 0.0
    %605 = vmatpush2.msra.mxu0 0.0
    %606 = vmatprep.subr.mxu0 0.0
    %607 = vmatpush2.msra.mxu0 0.0
    %608 = vmatprep.subr.mxu0 0.0
    %609 = vmatpush2.msra.mxu0 0.0
    %610 = vmatprep.subr.mxu0 0.0
    %611 = vmatpush2.msra.mxu0 0.0
    %612 = vmatprep.subr.mxu0 0.0
    %613 = vmatpush2.msra.mxu0 0.0
    %614 = vmatprep.subr.mxu0 0.0
    %615 = vmatpush2.msra.mxu0 0.0
    %616 = vmatprep.subr.mxu0 0.0
    %617 = vmatpush2.msra.mxu0 0.0
    %618 = vmatprep.subr.mxu0 0.0
    %619 = vmatpush2.msra.mxu0 0.0
    %620 = vmatprep.subr.mxu0 0.0
    %621 = vmatpush2.msra.mxu0 0.0
    %622 = vmatprep.subr.mxu0 0.0
    %623 = vmatpush2.msra.mxu0 0.0
    %624 = vmatprep.subr.mxu0 0.0
    %625 = vmatpush2.msra.mxu0 0.0
    %626 = vmatprep.subr.mxu0 0.0
    %627 = vmatpush2.msra.mxu0 0.0
    %628 = vmatprep.mubr.f32.mxu0 0.0
    %629 = vmatmul.mubr.f32.gmra.mxu0 %v559
    %v630 = vpop.f32.mrf.mxu0
    %v631 = vadd.f32 %v556, %v630
    %v632 = vpop.f32.mrf.mxu0
    %633 = vmatprep.mubr.f32.mxu0 0.0
    %634 = vmatmul.mubr.f32.gmra.mxu0 %v562
    %v635 = vpop.f32.mrf.mxu0
    %v636 = vadd.f32 %v556, %v635
    %v637 = vpop.f32.mrf.mxu0
    %638 = vdwg.mxu0
    %vm639 = vcmp.gt.f32.partialorder %v631, 0.0
    %vm640 = vcmp.gt.f32.partialorder %v636, 0.0
    %v641 = vmul.f32 %v631, 1.442695
    %v642 = vpow.pop %v641
    %v643 = vmul.f32 %v636, 1.442695
    %v644 = vpow.pop %v643
    %v645 = vsub.f32 %v642, 1.0
    %v646 = vsub.f32 %v644, 1.0
    %v647 = vsel %vm639, %v631, %v645
    %v648 = vsel %vm640, %v636, %v646
    %v649 = vld [vmem:[#allocation2 + $0xe8] sm:$0xff]
    %v650 = vld [vmem:[#allocation2 + $0xf0] sm:$0xff]
    %651 = vmatprep.subr.mxu0 0.0
    %652 = vmatpush1.xpose.msra.mxu0 0.0
    %653 = vmatprep.subr.mxu0 0.0
    %654 = vmatpush1.xpose.msra.mxu0 0.0
    %655 = vmatprep.subr.mxu0 0.0
    %656 = vmatpush1.xpose.msra.mxu0 0.0
    %657 = vmatprep.subr.mxu0 0.0
    %658 = vmatpush1.xpose.msra.mxu0 0.0
    %659 = vmatprep.subr.mxu0 0.0
    %660 = vmatpush1.xpose.msra.mxu0 0.0
    %661 = vmatprep.subr.mxu0 0.0
    %662 = vmatpush1.xpose.msra.mxu0 0.0
    %663 = vmatprep.subr.mxu0 0.0
    %664 = vmatpush1.xpose.msra.mxu0 0.0
    %665 = vmatprep.subr.mxu0 0.0
    %666 = vmatpush1.xpose.msra.mxu0 0.0
    %667 = vmatprep.subr.mxu0 0.0
    %668 = vmatpush1.xpose.msra.mxu0 0.0
    %669 = vmatprep.subr.mxu0 0.0
    %670 = vmatpush1.xpose.msra.mxu0 0.0
    %671 = vmatprep.subr.mxu0 0.0
    %672 = vmatpush1.xpose.msra.mxu0 0.0
    %673 = vmatprep.subr.mxu0 0.0
    %674 = vmatpush1.xpose.msra.mxu0 0.0
    %675 = vmatprep.subr.mxu0 0.0
    %676 = vmatpush1.xpose.msra.mxu0 0.0
    %677 = vmatprep.subr.mxu0 0.0
    %678 = vmatpush1.xpose.msra.mxu0 0.0
    %679 = vmatprep.subr.mxu0 0.0
    %680 = vmatpush1.xpose.msra.mxu0 %v650
    %681 = vmatprep.subr.mxu0 0.0
    %682 = vmatpush1.xpose.msra.mxu0 %v649
    %683 = vmatprep.subr.mxu0 0.0
    %684 = vmatpush2.xpose.msra.mxu0 0.0
    %685 = vmatprep.subr.mxu0 0.0
    %686 = vmatpush2.xpose.msra.mxu0 0.0
    %687 = vmatprep.subr.mxu0 0.0
    %688 = vmatpush2.xpose.msra.mxu0 0.0
    %689 = vmatprep.subr.mxu0 0.0
    %690 = vmatpush2.xpose.msra.mxu0 0.0
    %691 = vmatprep.subr.mxu0 0.0
    %692 = vmatpush2.xpose.msra.mxu0 0.0
    %693 = vmatprep.subr.mxu0 0.0
    %694 = vmatpush2.xpose.msra.mxu0 0.0
    %695 = vmatprep.subr.mxu0 0.0
    %696 = vmatpush2.xpose.msra.mxu0 0.0
    %697 = vmatprep.subr.mxu0 0.0
    %698 = vmatpush2.xpose.msra.mxu0 0.0
    %699 = vmatprep.subr.mxu0 0.0
    %700 = vmatpush2.xpose.msra.mxu0 0.0
    %701 = vmatprep.subr.mxu0 0.0
    %702 = vmatpush2.xpose.msra.mxu0 0.0
    %703 = vmatprep.subr.mxu0 0.0
    %704 = vmatpush2.xpose.msra.mxu0 0.0
    %705 = vmatprep.subr.mxu0 0.0
    %706 = vmatpush2.xpose.msra.mxu0 0.0
    %707 = vmatprep.subr.mxu0 0.0
    %708 = vmatpush2.xpose.msra.mxu0 0.0
    %709 = vmatprep.subr.mxu0 0.0
    %710 = vmatpush2.xpose.msra.mxu0 0.0
    %711 = vmatprep.subr.mxu0 0.0
    %712 = vmatpush2.xpose.msra.mxu0 0.0
    %713 = vmatprep.subr.mxu0 0.0
    %714 = vmatpush2.xpose.msra.mxu0 0.0
    %715 = vmatprep.mubr.f32.mxu0 0.0
    %716 = vmatmul.mubr.f32.gmra.mxu0 %v647
    %v717 = vpop.f32.mrf.mxu0
    %v718 = vadd.f32 0.0, %v717
    %v719 = vpop.f32.mrf.mxu0
    %720 = vmatprep.mubr.f32.mxu0 0.0
    %721 = vmatmul.mubr.f32.gmra.mxu0 %v648
    %v722 = vpop.f32.mrf.mxu0
    %v723 = vadd.f32 0.0, %v722
    %v724 = vpop.f32.mrf.mxu0
    %725 = vdwg.mxu0
    %v726 = vld [vmem:[#allocation2 + $0xf8] sm:$0xff]
    %v727 = vld [vmem:[#allocation2 + $0x100] sm:$0xff]
    %v728 = vld [vmem:[#allocation2 + $0x108] sm:$0xff]
    %v729 = vld [vmem:[#allocation2 + $0x110] sm:$0xff]
    %v730 = vmul.f32 %v718, %v728
    %v731 = vmul.f32 %v723, %v729
    %v732 = vsel %vm300, %v730, 0.0
    %733 = vadd.xlane.f32.xlu0 %v732
    %v734 = vpop.xlane.xlu0 %733
    %v735 = vsel %vm300, %v731, 0.0
    %736 = vadd.xlane.f32.xlu0 %v735
    %v737 = vpop.xlane.xlu0 %736
    %v739 = vsel %vm300, %v726, 0
    %v742 = vsel %vm300, %v727, 0
    %v745 = vsel %vm300, %v718, 0
    %v748 = vsel %vm300, %v723, 0
    %750 = vmatprep.subr.mxu0 0.0
    %751 = vmatpush1.xpose.msra.mxu0 0.0
    %752 = vmatprep.subr.mxu0 0.0
    %753 = vmatpush1.xpose.msra.mxu0 0.0
    %754 = vmatprep.subr.mxu0 0.0
    %755 = vmatpush1.xpose.msra.mxu0 0.0
    %756 = vmatprep.subr.mxu0 0.0
    %757 = vmatpush1.xpose.msra.mxu0 0.0
    %758 = vmatprep.subr.mxu0 0.0
    %759 = vmatpush1.xpose.msra.mxu0 0.0
    %760 = vmatprep.subr.mxu0 0.0
    %761 = vmatpush1.xpose.msra.mxu0 0.0
    %762 = vmatprep.subr.mxu0 0.0
    %763 = vmatpush1.xpose.msra.mxu0 0.0
    %764 = vmatprep.subr.mxu0 0.0
    %765 = vmatpush1.xpose.msra.mxu0 0.0
    %766 = vmatprep.subr.mxu0 0.0
    %767 = vmatpush1.xpose.msra.mxu0 0.0
    %768 = vmatprep.subr.mxu0 0.0
    %769 = vmatpush1.xpose.msra.mxu0 0.0
    %770 = vmatprep.subr.mxu0 0.0
    %771 = vmatpush1.xpose.msra.mxu0 0.0
    %772 = vmatprep.subr.mxu0 0.0
    %773 = vmatpush1.xpose.msra.mxu0 0.0
    %774 = vmatprep.subr.mxu0 0.0
    %775 = vmatpush1.xpose.msra.mxu0 0.0
    %776 = vmatprep.subr.mxu0 0.0
    %777 = vmatpush1.xpose.msra.mxu0 0.0
    %778 = vmatprep.subr.mxu0 0.0
    %779 = vmatpush1.xpose.msra.mxu0 %v748
    %780 = vmatprep.subr.mxu0 0.0
    %781 = vmatpush1.xpose.msra.mxu0 %v745
    %782 = vmatprep.subr.mxu0 0.0
    %783 = vmatpush2.xpose.msra.mxu0 0.0
    %784 = vmatprep.subr.mxu0 0.0
    %785 = vmatpush2.xpose.msra.mxu0 0.0
    %786 = vmatprep.subr.mxu0 0.0
    %787 = vmatpush2.xpose.msra.mxu0 0.0
    %788 = vmatprep.subr.mxu0 0.0
    %789 = vmatpush2.xpose.msra.mxu0 0.0
    %790 = vmatprep.subr.mxu0 0.0
    %791 = vmatpush2.xpose.msra.mxu0 0.0
    %792 = vmatprep.subr.mxu0 0.0
    %793 = vmatpush2.xpose.msra.mxu0 0.0
    %794 = vmatprep.subr.mxu0 0.0
    %795 = vmatpush2.xpose.msra.mxu0 0.0
    %796 = vmatprep.subr.mxu0 0.0
    %797 = vmatpush2.xpose.msra.mxu0 0.0
    %798 = vmatprep.subr.mxu0 0.0
    %799 = vmatpush2.xpose.msra.mxu0 0.0
    %800 = vmatprep.subr.mxu0 0.0
    %801 = vmatpush2.xpose.msra.mxu0 0.0
    %802 = vmatprep.subr.mxu0 0.0
    %803 = vmatpush2.xpose.msra.mxu0 0.0
    %804 = vmatprep.subr.mxu0 0.0
    %805 = vmatpush2.xpose.msra.mxu0 0.0
    %806 = vmatprep.subr.mxu0 0.0
    %807 = vmatpush2.xpose.msra.mxu0 0.0
    %808 = vmatprep.subr.mxu0 0.0
    %809 = vmatpush2.xpose.msra.mxu0 0.0
    %810 = vmatprep.subr.mxu0 0.0
    %811 = vmatpush2.xpose.msra.mxu0 0.0
    %812 = vmatprep.subr.mxu0 0.0
    %813 = vmatpush2.xpose.msra.mxu0 0.0
    %814 = vmatprep.mubr.f32.mxu0 0.0
    %815 = vmatmul.mubr.f32.gmra.mxu0 %v739
    %v816 = vpop.f32.mrf.mxu0
    %v817 = vadd.f32 0.0, %v816
    %v818 = vpop.f32.mrf.mxu0
    %819 = vmatprep.mubr.f32.mxu0 0.0
    %820 = vmatmul.mubr.f32.gmra.mxu0 %v742
    %v821 = vpop.f32.mrf.mxu0
    %v822 = vadd.f32 0.0, %v821
    %v823 = vpop.f32.mrf.mxu0
    %824 = vdwg.mxu0
    %v825 = vadd.f32 %v734, %v817
    %v826 = vadd.f32 %v737, %v822
    %vm827 = vcmp.gt.f32.partialorder %v825, 0.0
    %vm828 = vcmp.gt.f32.partialorder %v826, 0.0
    %v829 = vmul.f32 %v825, 0.2
    %v830 = vmul.f32 %v826, 0.2
    %v831 = vsel %vm827, %v825, %v829
    %v832 = vsel %vm828, %v826, %v830
    %v833 = vsel %vm300, %v831, -inf
    %834 = vmax.xlane.f32.xlu0 %v833
    %v835 = vpop.xlane.xlu0 %834
    %v836 = vsel %vm300, %v832, -inf
    %837 = vmax.xlane.f32.xlu0 %v836
    %v838 = vpop.xlane.xlu0 %837
    %v839 = vsub.f32 %v831, %v835
    %v840 = vsub.f32 %v832, %v838
    %v841 = vmul.f32 %v839, 1.442695
    %v842 = vpow.pop %v841
    %v843 = vmul.f32 %v840, 1.442695
    %v844 = vpow.pop %v843
    %v845 = vmul.f32 %v842, %v33
    %v846 = vmul.f32 %v844, %v34
    %v847 = vsel %vm300, %v845, 0.0
    %848 = vadd.xlane.f32.xlu0 %v847
    %v849 = vpop.xlane.xlu0 %848
    %v850 = vsel %vm300, %v846, 0.0
    %851 = vadd.xlane.f32.xlu0 %v850
    %v852 = vpop.xlane.xlu0 %851
    %v853 = vmax.f32 %v849, 1e-30
    %v854 = vmax.f32 %v852, 1e-30
    %v855 = vrcp.pop %v853
    %v856 = vrcp.pop %v854
    %v857 = vmul.f32 %v845, %v855
    %v858 = vmul.f32 %v846, %v856
    %v859 = vld [vmem:[#allocation2 + $0x118] sm:$0x1]
    %v860 = vlaneseq
    %v861 = vshrl.u32 %v860, 7
    %v862 = vsub.s32 0, %v861
    %v863 = vrot.slane %v859, %v862
    %v865 = vsel %vm300, %v857, 0
    %v868 = vsel %vm300, %v858, 0
    %870 = vmatprep.subr.mxu0 0.0
    %871 = vmatpush1.msra.mxu0 0.0
    %872 = vmatprep.subr.mxu0 0.0
    %873 = vmatpush1.msra.mxu0 0.0
    %874 = vmatprep.subr.mxu0 0.0
    %875 = vmatpush1.msra.mxu0 0.0
    %876 = vmatprep.subr.mxu0 0.0
    %877 = vmatpush1.msra.mxu0 0.0
    %878 = vmatprep.subr.mxu0 0.0
    %879 = vmatpush1.msra.mxu0 0.0
    %880 = vmatprep.subr.mxu0 0.0
    %881 = vmatpush1.msra.mxu0 0.0
    %882 = vmatprep.subr.mxu0 0.0
    %883 = vmatpush1.msra.mxu0 0.0
    %884 = vmatprep.subr.mxu0 0.0
    %885 = vmatpush1.msra.mxu0 0.0
    %886 = vmatprep.subr.mxu0 0.0
    %887 = vmatpush1.msra.mxu0 0.0
    %888 = vmatprep.subr.mxu0 0.0
    %889 = vmatpush1.msra.mxu0 0.0
    %890 = vmatprep.subr.mxu0 0.0
    %891 = vmatpush1.msra.mxu0 0.0
    %892 = vmatprep.subr.mxu0 0.0
    %893 = vmatpush1.msra.mxu0 0.0
    %894 = vmatprep.subr.mxu0 0.0
    %895 = vmatpush1.msra.mxu0 0.0
    %896 = vmatprep.subr.mxu0 0.0
    %897 = vmatpush1.msra.mxu0 0.0
    %898 = vmatprep.subr.mxu0 0.0
    %899 = vmatpush1.msra.mxu0 %v723
    %900 = vmatprep.subr.mxu0 0.0
    %901 = vmatpush1.msra.mxu0 %v718
    %902 = vmatprep.subr.mxu0 0.0
    %903 = vmatpush2.msra.mxu0 0.0
    %904 = vmatprep.subr.mxu0 0.0
    %905 = vmatpush2.msra.mxu0 0.0
    %906 = vmatprep.subr.mxu0 0.0
    %907 = vmatpush2.msra.mxu0 0.0
    %908 = vmatprep.subr.mxu0 0.0
    %909 = vmatpush2.msra.mxu0 0.0
    %910 = vmatprep.subr.mxu0 0.0
    %911 = vmatpush2.msra.mxu0 0.0
    %912 = vmatprep.subr.mxu0 0.0
    %913 = vmatpush2.msra.mxu0 0.0
    %914 = vmatprep.subr.mxu0 0.0
    %915 = vmatpush2.msra.mxu0 0.0
    %916 = vmatprep.subr.mxu0 0.0
    %917 = vmatpush2.msra.mxu0 0.0
    %918 = vmatprep.subr.mxu0 0.0
    %919 = vmatpush2.msra.mxu0 0.0
    %920 = vmatprep.subr.mxu0 0.0
    %921 = vmatpush2.msra.mxu0 0.0
    %922 = vmatprep.subr.mxu0 0.0
    %923 = vmatpush2.msra.mxu0 0.0
    %924 = vmatprep.subr.mxu0 0.0
    %925 = vmatpush2.msra.mxu0 0.0
    %926 = vmatprep.subr.mxu0 0.0
    %927 = vmatpush2.msra.mxu0 0.0
    %928 = vmatprep.subr.mxu0 0.0
    %929 = vmatpush2.msra.mxu0 0.0
    %930 = vmatprep.subr.mxu0 0.0
    %931 = vmatpush2.msra.mxu0 0.0
    %932 = vmatprep.subr.mxu0 0.0
    %933 = vmatpush2.msra.mxu0 0.0
    %934 = vmatprep.mubr.f32.mxu0 0.0
    %935 = vmatmul.mubr.f32.gmra.mxu0 %v865
    %v936 = vpop.f32.mrf.mxu0
    %v937 = vadd.f32 %v863, %v936
    %v938 = vpop.f32.mrf.mxu0
    %939 = vmatprep.mubr.f32.mxu0 0.0
    %940 = vmatmul.mubr.f32.gmra.mxu0 %v868
    %v941 = vpop.f32.mrf.mxu0
    %v942 = vadd.f32 %v863, %v941
    %v943 = vpop.f32.mrf.mxu0
    %944 = vdwg.mxu0
    %v945 = vld [vmem:[%s2] sm:$0x3]
    %v947 = vsel %vm300, %v945, 0
    %949 = vmatprep.subr.mxu0 0.0
    %950 = vmatpush1.msra.mxu0 0.0
    %951 = vmatprep.subr.mxu0 0.0
    %952 = vmatpush1.msra.mxu0 0.0
    %953 = vmatprep.subr.mxu0 0.0
    %954 = vmatpush1.msra.mxu0 0.0
    %955 = vmatprep.subr.mxu0 0.0
    %956 = vmatpush1.msra.mxu0 0.0
    %957 = vmatprep.subr.mxu0 0.0
    %958 = vmatpush1.msra.mxu0 0.0
    %959 = vmatprep.subr.mxu0 0.0
    %960 = vmatpush1.msra.mxu0 0.0
    %961 = vmatprep.subr.mxu0 0.0
    %962 = vmatpush1.msra.mxu0 0.0
    %963 = vmatprep.subr.mxu0 0.0
    %964 = vmatpush1.msra.mxu0 0.0
    %965 = vmatprep.subr.mxu0 0.0
    %966 = vmatpush1.msra.mxu0 0.0
    %967 = vmatprep.subr.mxu0 0.0
    %968 = vmatpush1.msra.mxu0 0.0
    %969 = vmatprep.subr.mxu0 0.0
    %970 = vmatpush1.msra.mxu0 0.0
    %971 = vmatprep.subr.mxu0 0.0
    %972 = vmatpush1.msra.mxu0 0.0
    %973 = vmatprep.subr.mxu0 0.0
    %974 = vmatpush1.msra.mxu0 0.0
    %975 = vmatprep.subr.mxu0 0.0
    %976 = vmatpush1.msra.mxu0 0.0
    %977 = vmatprep.subr.mxu0 0.0
    %978 = vmatpush1.msra.mxu0 %v942
    %979 = vmatprep.subr.mxu0 0.0
    %980 = vmatpush1.msra.mxu0 %v937
    %981 = vmatprep.subr.mxu0 0.0
    %982 = vmatpush2.msra.mxu0 0.0
    %983 = vmatprep.subr.mxu0 0.0
    %984 = vmatpush2.msra.mxu0 0.0
    %985 = vmatprep.subr.mxu0 0.0
    %986 = vmatpush2.msra.mxu0 0.0
    %987 = vmatprep.subr.mxu0 0.0
    %988 = vmatpush2.msra.mxu0 0.0
    %989 = vmatprep.subr.mxu0 0.0
    %990 = vmatpush2.msra.mxu0 0.0
    %991 = vmatprep.subr.mxu0 0.0
    %992 = vmatpush2.msra.mxu0 0.0
    %993 = vmatprep.subr.mxu0 0.0
    %994 = vmatpush2.msra.mxu0 0.0
    %995 = vmatprep.subr.mxu0 0.0
    %996 = vmatpush2.msra.mxu0 0.0
    %997 = vmatprep.subr.mxu0 0.0
    %998 = vmatpush2.msra.mxu0 0.0
    %999 = vmatprep.subr.mxu0 0.0
    %1000 = vmatpush2.msra.mxu0 0.0
    %1001 = vmatprep.subr.mxu0 0.0
    %1002 = vmatpush2.msra.mxu0 0.0
    %1003 = vmatprep.subr.mxu0 0.0
    %1004 = vmatpush2.msra.mxu0 0.0
    %1005 = vmatprep.subr.mxu0 0.0
    %1006 = vmatpush2.msra.mxu0 0.0
    %1007 = vmatprep.subr.mxu0 0.0
    %1008 = vmatpush2.msra.mxu0 0.0
    %1009 = vmatprep.subr.mxu0 0.0
    %1010 = vmatpush2.msra.mxu0 0.0
    %1011 = vmatprep.subr.mxu0 0.0
    %1012 = vmatpush2.msra.mxu0 0.0
    %1013 = vmatprep.mubr.f32.mxu0 0.0
    %1014 = vmatmul.mubr.f32.gmra.mxu0 %v947
    %v1015 = vpop.f32.mrf.mxu0
    %v1016 = vadd.f32 0.0, %v1015
    %v1017 = vpop.f32.mrf.mxu0
    %1018 = vdwg.mxu0
    %v1019 = vmax.f32 %v1016, 0.0
    %v1020 = vld [vmem:[#allocation2 + $0x120] sm:$0x1]
    %v1021 = vlaneseq
    %v1022 = vshrl.u32 %v1021, 7
    %v1023 = vsub.s32 0, %v1022
    %v1024 = vrot.slane %v1020, %v1023
    %v1025 = vmul.f32 %v1019, %v1024
    %vm1026 = vcmask 123904
    %v1027 = vsel %vm1026, %v1025, 0.0
    %1028 = vadd.xlane.f32.xlu0 %v1027
    %v1029 = vpop.xlane.xlu0 %1028
    %v1030 = vld [vmem:[#allocation2 + $0x128] sm:$0x1]
    %v1031 = vlaneseq
    %v1032 = vshrl.u32 %v1031, 7
    %v1033 = vsub.s32 0, %v1032
    %v1034 = vrot.slane %v1030, %v1033
    %v1035 = vadd.f32 %v1029, %v1034
    %vm1036 = vcmask 1024
    %1037 = vst.msk [vmem:[%s4] sm:$0x3] %vm1036, %v1035
    // Predicated region
    $region22: #{net_forward.1} parent=1 // pred_check
      _
    $region23: #{net_forward.1} parent=1 // pred_check_branch
      %1039 = sbr.rel (0) target = $region25
    $region24: #{net_forward.1} parent=1 // pred_region
      _
    $region25: #{net_forward.1} parent=1 // pred_fallthru
      _
    // Predicated region
    $region26: #{net_forward.1} parent=1 // pred_check
      _
    $region27: #{net_forward.1} parent=1 // pred_check_branch
      %1041 = sbr.rel (0) target = $region29
    $region28: #{net_forward.1} parent=1 // pred_region
      _
    $region29: #{net_forward.1} parent=1 // pred_fallthru
      _
    %1042 = vsyncpa [#allocation3], 1

</llo_original>
